<compile_context>
chip_gen: v7x
topology: tpu7x:2x2x1
jax: 0.10.0
libtpu: 0.0.40
codegen_flags: <defaults>
</compile_context>

<pallas_src>
import math

import jax
import jax.numpy as jnp
from jax.experimental import pallas as pl
from jax.experimental.pallas import tpu as pltpu


def make_inv_freq(dim, t_min=0.0001, t_max=4.0):
    """Deterministic parameter init, exactly matching the PyTorch __init__."""
    half = dim // 2
    quarter = dim // 4
    idx = jnp.arange(0, half, 2, dtype=jnp.float32) / float(half)  # (dim//4,)
    nonzero = 2.0 * math.pi / (t_min * (t_max / t_min) ** idx)     # (dim//4,)
    inv_freq = jnp.zeros((half,), dtype=jnp.float32)
    inv_freq = inv_freq.at[:quarter].set(nonzero)
    return inv_freq


def _make_rotary_kernel(k, dim):
    """k timestamps packed per output row; one full-width store per block."""

    def kernel(t_ref, invf_ref, out_ref):
        # t_ref:    (TM, k)     f32  -- packed timestamps (group-major)
        # invf_ref: (1, width)  f32  -- interleave-repeated (+tiled/padded) inv_freq
        # out_ref:  (TM, width) out_dtype -- lane-dense output block
        t = t_ref[...]
        invf = invf_ref[...]
        if k == 1:
            # width >= dim; padded invf lanes are zero -> zero output lanes.
            block = t * invf
        else:
            base = invf[:, 0:dim]                               # (1, dim)
            parts = [t[:, g:g + 1] * base for g in range(k)]    # k x (TM, dim)
            block = jnp.concatenate(parts, axis=-1)             # (TM, k*dim)
        out_ref[...] = block.astype(out_ref.dtype)              # single vst

    return kernel


def rotary_embedding_forward(timestamps, inv_freq, dim, *,
                             out_dtype=jnp.float32, block_rows=None):
    """Pallas forward: returns freqs of shape (*timestamps.shape, dim).

    out_dtype=jnp.bfloat16 halves HBM writeback (kernel is writeback-bound)
    but deviates from the module's float32 output contract.
    """
    orig_shape = timestamps.shape
    t_flat = timestamps.reshape(-1).astype(jnp.float32)
    n = t_flat.shape[0]
    out_itemsize = jnp.dtype(out_dtype).itemsize

    # ---- Lane-dense output layout -------------------------------------------
    # Pack k timestamps per output row so the output's last dim (width) is a
    # multiple of 128 -> every HBM store is an unmasked full-lane vst.
    width_lcm = math.lcm(dim, 128)
    if width_lcm <= 1024:
        k = width_lcm // dim
        width = width_lcm
        pad_lanes = 0
    else:  # keep a single timestamp per row, zero-pad lanes up to 128-multiple
        k = 1
        width = ((dim + 127) // 128) * 128
        pad_lanes = width - dim

    rows = pl.cdiv(n, k)
    rows8 = max(8, ((rows + 7) // 8) * 8)

    # ---- Block sizing (VMEM budget incl. the lane-padded input buffer) ------
    if block_rows is None:
        in_row_bytes = ((k + 127) // 128) * 128 * 4      # (tm, k) f32, lane-padded
        out_row_bytes = width * out_itemsize
        budget = 24 * 1024 * 1024                        # in+out, double-buffered
        block_rows = budget // (2 * (in_row_bytes + out_row_bytes))
    tm = max(8, (min(block_rows, rows8) // 8) * 8)

    n_blocks = pl.cdiv(rows8, tm)
    rows_pad = n_blocks * tm
    n_pad = rows_pad * k

    # Zero-pad the ragged tail; padded rows produce zeros and are sliced off.
    t2d = jnp.pad(t_flat, (0, n_pad - n)).reshape(rows_pad, k)

    # repeat '... n -> ... (n r)', r=2 folded into the tiny parameter; ship it
    # as a single full-lane-width row (tiled, or zero-padded in the fallback).
    inv_rep = jnp.repeat(inv_freq.astype(jnp.float32), 2)          # (dim,)
    if k > 1:
        inv_row = jnp.tile(inv_rep, (k,))[None, :]                 # (1, width)
    else:
        inv_row = jnp.pad(inv_rep, (0, pad_lanes))[None, :]        # (1, width)

    cost = pl.CostEstimate(
        flops=n * dim,
        transcendentals=0,
        bytes_accessed=n * 4 + n * dim * out_itemsize,
    )

    out = pl.pallas_call(
        _make_rotary_kernel(k, dim),
        out_shape=jax.ShapeDtypeStruct((rows_pad, width), out_dtype),
        grid=(n_blocks,),
        in_specs=[
            pl.BlockSpec((tm, k), lambda i: (i, 0)),
            pl.BlockSpec((1, width), lambda i: (0, 0)),
        ],
        out_specs=pl.BlockSpec((tm, width), lambda i: (i, 0)),
        compiler_params=pltpu.CompilerParams(
            dimension_semantics=("parallel",),
            vmem_limit_bytes=32 * 1024 * 1024,
        ),
        cost_estimate=cost,
    )(t2d, inv_row)

    if k > 1:
        # Group-major packing => un-pack is a contiguous (free) reshape.
        out = out.reshape(n_pad, dim)[:n]
    else:
        out = out[:n, :dim]      # drop padded lanes / padded rows
    return out.reshape(*orig_shape, dim)


def rotary_embedding_ref(timestamps, inv_freq, dim):
    """Pure-JAX reference mirroring the PyTorch forward exactly."""
    freqs = timestamps[..., None].astype(jnp.float32) * inv_freq  # (..., dim//2)
    freqs = jnp.repeat(freqs, 2, axis=-1)                         # (..., dim)
    return freqs


if __name__ == "__main__":
    dim = 32
    batch, seq = 2, 8

    key = jax.random.PRNGKey(0)
    # timestamps in [0, 4) seconds, shape (batch, seq)
    timestamps = jax.random.uniform(key, (batch, seq), dtype=jnp.float32) * 4.0
    inv_freq = make_inv_freq(dim, t_min=0.0001, t_max=4.0)

    out = rotary_embedding_forward(timestamps, inv_freq, dim)
    out = jax.block_until_ready(out)
    ref = rotary_embedding_ref(timestamps, inv_freq, dim)
    assert out.shape == (batch, seq, dim), out.shape
    assert jnp.allclose(out, ref, atol=1e-5, rtol=1e-5), "mismatch vs reference"

    # Multi-tile grid + ragged-padding path with a tiny block size.
    t2 = jax.random.uniform(jax.random.PRNGKey(1), (3, 50), dtype=jnp.float32) * 4.0
    out2 = jax.block_until_ready(
        rotary_embedding_forward(t2, inv_freq, dim, block_rows=8))
    ref2 = rotary_embedding_ref(t2, inv_freq, dim)
    assert out2.shape == (3, 50, dim), out2.shape
    assert jnp.allclose(out2, ref2, atol=1e-5, rtol=1e-5), "mismatch (tiled path)"

    # bf16 writeback option (halves HBM traffic; relaxed tolerance).
    out_bf16 = jax.block_until_ready(
        rotary_embedding_forward(timestamps, inv_freq, dim, out_dtype=jnp.bfloat16))
    assert out_bf16.dtype == jnp.bfloat16
    assert jnp.allclose(out_bf16.astype(jnp.float32), ref, rtol=1e-2, atol=1e-2), \
        "mismatch (bf16 path)"

    # dim that does not divide 128 and has a large lcm -> padded-lane fallback.
    dim3 = 72
    inv_freq3 = make_inv_freq(dim3, t_min=0.0001, t_max=4.0)
    t3 = jax.random.uniform(jax.random.PRNGKey(2), (2, 10), dtype=jnp.float32) * 4.0
    out3 = jax.block_until_ready(rotary_embedding_forward(t3, inv_freq3, dim3))
    ref3 = rotary_embedding_ref(t3, inv_freq3, dim3)
    assert out3.shape == (2, 10, dim3), out3.shape
    assert jnp.allclose(out3, ref3, atol=1e-5, rtol=1e-5), "mismatch (padded-lane path)"

    print("KERNEL_OK")
</pallas_src>

<mosaic_0001>
module attributes {stable_mosaic.version = 11 : i64} {
  func.func @kernel(%arg0: i32, %arg1: memref<8x4xf32, #tpu.memory_space<vmem>>, %arg2: memref<1x128xf32, #tpu.memory_space<vmem>>, %arg3: memref<8x128xf32, #tpu.memory_space<vmem>>) attributes {dimension_semantics = [#tpu.dimension_semantics<parallel>], iteration_bounds = array<i64: 1>, scalar_prefetch = 0 : i64, scratch_operands = 0 : i64, tpu.core_type = #tpu.core_type<tc>, window_params = [{transform_indices = @transform_0, window_bounds = array<i64: 8, 4>}, {pipeline_mode = #tpu.pipeline_mode<synchronous>, transform_indices = @transform_1, window_bounds = array<i64: 1, 128>}, {transform_indices = @transform_2, window_bounds = array<i64: 8, 128>}]} {
    %c0 = arith.constant 0 : index
    %c0_0 = arith.constant 0 : index
    %0 = vector.load %arg1[%c0, %c0_0] : memref<8x4xf32, #tpu.memory_space<vmem>>, vector<8x4xf32>
    %c0_1 = arith.constant 0 : index
    %c0_2 = arith.constant 0 : index
    %1 = vector.load %arg2[%c0_1, %c0_2] : memref<1x128xf32, #tpu.memory_space<vmem>>, vector<1x128xf32>
    %2 = vector.extract_strided_slice %1 {offsets = [0, 0], sizes = [1, 32], strides = [1, 1]} : vector<1x128xf32> to vector<1x32xf32>
    %3 = vector.extract_strided_slice %0 {offsets = [0, 0], sizes = [8, 1], strides = [1, 1]} : vector<8x4xf32> to vector<8x1xf32>
    %4 = vector.broadcast %3 : vector<8x1xf32> to vector<8x32xf32>
    %5 = vector.broadcast %2 : vector<1x32xf32> to vector<8x32xf32>
    %6 = arith.mulf %4, %5 : vector<8x32xf32>
    %7 = vector.extract_strided_slice %0 {offsets = [0, 1], sizes = [8, 1], strides = [1, 1]} : vector<8x4xf32> to vector<8x1xf32>
    %8 = vector.broadcast %7 : vector<8x1xf32> to vector<8x32xf32>
    %9 = vector.broadcast %2 : vector<1x32xf32> to vector<8x32xf32>
    %10 = arith.mulf %8, %9 : vector<8x32xf32>
    %11 = vector.extract_strided_slice %0 {offsets = [0, 2], sizes = [8, 1], strides = [1, 1]} : vector<8x4xf32> to vector<8x1xf32>
    %12 = vector.broadcast %11 : vector<8x1xf32> to vector<8x32xf32>
    %13 = vector.broadcast %2 : vector<1x32xf32> to vector<8x32xf32>
    %14 = arith.mulf %12, %13 : vector<8x32xf32>
    %15 = vector.extract_strided_slice %0 {offsets = [0, 3], sizes = [8, 1], strides = [1, 1]} : vector<8x4xf32> to vector<8x1xf32>
    %16 = vector.broadcast %15 : vector<8x1xf32> to vector<8x32xf32>
    %17 = vector.broadcast %2 : vector<1x32xf32> to vector<8x32xf32>
    %18 = arith.mulf %16, %17 : vector<8x32xf32>
    %19 = tpu.concatenate %6, %10, %14, %18 in 1 : vector<8x32xf32>, vector<8x32xf32>, vector<8x32xf32>, vector<8x32xf32> -> vector<8x128xf32>
    %c0_3 = arith.constant 0 : index
    %c0_4 = arith.constant 0 : index
    %20 = vector.load %arg3[%c0_3, %c0_4] : memref<8x128xf32, #tpu.memory_space<vmem>>, vector<8x128xf32>
    tpu.vector_store %arg3[%c0_3, %c0_4], %19 {strides = array<i32>} : memref<8x128xf32, #tpu.memory_space<vmem>>, vector<8x128xf32>,
    return
  }
  func.func @transform_0(%arg0: i32) -> (i32, i32) {
    %c0_i32 = arith.constant 0 : i32
    %c0_i32_0 = arith.constant 0 : i32
    return %arg0, %c0_i32 : i32, i32
  }
  func.func @transform_1(%arg0: i32) -> (i32, i32) {
    %c0_i32 = arith.constant 0 : i32
    %c0_i32_0 = arith.constant 0 : i32
    %c0_i32_1 = arith.constant 0 : i32
    return %c0_i32, %c0_i32_0 : i32, i32
  }
  func.func @transform_2(%arg0: i32) -> (i32, i32) {
    %c0_i32 = arith.constant 0 : i32
    %c0_i32_0 = arith.constant 0 : i32
    return %arg0, %c0_i32 : i32, i32
  }
}

</mosaic_0001>

<llo_original>
// kernel: tpu_custom_call.1
$region0: #{tpu_custom_call.1}
  #allocation0 [shape = 'u32[]', space=smem, size = 0x4, offset = 0x4, fixed_abs, tag = 'smem constant byte address 0x4 - core index']
  #allocation1 [shape = 'u32[144,128]{1,0:T(1,128)}', space=vmem, size = 0x12000, scoped, tag = 'internal scratch']
  %s0 = inlined_call_operand.vmem [shape: f32[8,4], index: 0, kind: input, shape index: {}]
  %s1 = inlined_call_operand.vmem [shape: f32[1,128], index: 1, kind: input, shape index: {}]
  %s2 = inlined_call_operand.hbm [shape: f32[8,128], index: 2, kind: output, shape index: {}]
  %s3 = sld [smem:[#allocation0]]
  $region18: #{tpu_custom_call.1} parent=0
    _
  %s5 = ssub.s32 1, %s3
  %s6 = scalar_select 0, %s5, %s3
  $region1: #{tpu_custom_call.1} parent=0
    #allocation2 [shape = 'u8[4096]{0}', space=vmem, size = 0x1000, scoped, tag = 'output window, operand 0, single buffered']
    #allocation3 [shape = 's32[1]{0}', space=sflag, size = 0x4, scoped, tag = 'scoped memory for tpu_custom_call.1']
    %7 = vsyncpa [#allocation3], 0
    // Predicated region
    $region2: #{tpu_custom_call.1} parent=1 // pred_check
      _
    $region3: #{tpu_custom_call.1} parent=1 // pred_check_branch
      %9 = sbr.rel (0) target = $region5
    $region4: #{tpu_custom_call.1} parent=1 // pred_region
      _
    $region5: #{tpu_custom_call.1} parent=1 // pred_fallthru
      _
    // Predicated region
    $region6: #{tpu_custom_call.1} parent=1 // pred_check
      _
    $region7: #{tpu_custom_call.1} parent=1 // pred_check_branch
      %11 = sbr.rel (0) target = $region9
    $region8: #{tpu_custom_call.1} parent=1 // pred_region
      _
    $region9: #{tpu_custom_call.1} parent=1 // pred_fallthru
      _
    %v12 = vld [vmem:[%s0] sm:$0xff]
    %v13 = vld [vmem:[%s1] sm:$0x1]
    %15 = vset.pattern.permute.xlu0 0
    %16 = vperm.xlu0 %15, %v12
    %v17 = vpop.permute.xlu0 %16
    %v20 = vlaneseq
    %v21 = vshrl.u32 %v20, 7
    %v22 = vsub.s32 0, %v21
    %v23 = vrot.slane %v13, %v22
    %v25 = vmul.f32 %v17, %v23
    %26 = vset.pattern.permute.xlu0 1
    %27 = vperm.xlu0 %26, %v12
    %v28 = vpop.permute.xlu0 %27
    %v30 = vmul.f32 %v28, %v23
    %31 = vset.pattern.permute.xlu0 2
    %32 = vperm.xlu0 %31, %v12
    %v33 = vpop.permute.xlu0 %32
    %v35 = vmul.f32 %v33, %v23
    %36 = vset.pattern.permute.xlu0 3
    %37 = vperm.xlu0 %36, %v12
    %v38 = vpop.permute.xlu0 %37
    %v40 = vmul.f32 %v38, %v23
    %42 = vrot.lane.b32.xlu0 %v30, 32
    %v43 = vpop.permute.xlu0 %42
    %46 = vrot.lane.b32.xlu0 %v35, 64
    %v47 = vpop.permute.xlu0 %46
    %50 = vrot.lane.b32.xlu0 %v40, 96
    %v51 = vpop.permute.xlu0 %50
    %vm53 = vcmask 261120
    %v54 = vsel %vm53, %v25, %v43
    %vm55 = vcmask 523264
    %v56 = vsel %vm55, %v54, %v47
    %vm57 = vcmask 785408
    %v58 = vsel %vm57, %v56, %v51
    %59 = vst [vmem:[#allocation2] sm:$0xff] %v58
    // Predicated region
    $region10: #{tpu_custom_call.1} parent=1 // pred_check
      _
    $region11: #{tpu_custom_call.1} parent=1 // pred_check_branch
      %61 = sbr.rel (0) target = $region13
    $region12: #{tpu_custom_call.1} parent=1 // pred_region
      %s63 = ssub.s32 128, 128
      %64 = vsyncadd [#allocation3], %s63
      %s66 = sshll.u32 [#allocation2], 4
      %s67 = int_to_ptr.vmem [resolvable:$true] %s66
      %69 = dma.vmem_to_hbm [thread:$0]  %s67, 128, %s2, [#allocation3]
    $region13: #{tpu_custom_call.1} parent=1 // pred_fallthru
      _
    // Predicated region
    $region14: #{tpu_custom_call.1} parent=1 // pred_check
      _
    $region15: #{tpu_custom_call.1} parent=1 // pred_check_branch
      %71 = sbr.rel (0) target = $region17
    $region16: #{tpu_custom_call.1} parent=1 // pred_region
      %72 = dma.done [#allocation3], 128
    $region17: #{tpu_custom_call.1} parent=1 // pred_fallthru
      _
    %73 = vsyncpa [#allocation3], 1

</llo_original>
